<compile_context>
chip_gen: v7x
topology: tpu7x:2x2x1
jax: 0.10.0
libtpu: 0.0.40
codegen_flags: <defaults>
</compile_context>

<pallas_src>
import jax
import jax.numpy as jnp
from jax.experimental import pallas as pl
from jax.experimental.pallas import tpu as pltpu


def _cdiv(a, b):
    return -(-a // b)


def _round_up(a, b):
    return _cdiv(a, b) * b


def _mse_scaled_kernel(x_ref, t_ref, s_ref, o_ref, acc_ref):
    k = pl.program_id(1)

    @pl.when(k == 0)
    def _init():
        acc_ref[...] = jnp.zeros_like(acc_ref)

    # Cast AFTER the native-dtype DMA; all arithmetic in f32.
    diff = x_ref[...].astype(jnp.float32) - t_ref[...].astype(jnp.float32)
    acc_ref[...] += jnp.sum(diff * diff, axis=0, keepdims=True)        # (1, Cf)

    @pl.when(k == pl.num_programs(1) - 1)
    def _finalize():
        # s_ref already carries the 1/N scale and the g-fold tiling; the weighted
        # reduce is a lane-wise multiply + cross-lane reduce (VPU/XLU, no MXU).
        o_ref[...] = jnp.sum(acc_ref[...] * s_ref[...], axis=-1, keepdims=True)


def mse_loss_scaled(x, t, scaling_factors, *, num_partials=2, max_tile_rows=512):
    """x, t: (N, C) floating arrays; scaling_factors: (C,). Returns scalar f32."""
    x = jnp.asarray(x)
    t = jnp.asarray(t)
    n, c = x.shape
    assert t.shape == (n, c), (t.shape, (n, c))

    # Small batches: one partial avoids pointless extra grid iterations / padding.
    if n < 1024:
        num_partials = 1

    # ---- lane-density fold: (N, C) -> (N/g, g*C) (free row-major reshape) ----
    g = max(1, 128 // c) if c < 128 else 1
    cf = g * c

    # ---- tiling in folded-row space ----
    itemsize = x.dtype.itemsize
    rows_f = _cdiv(n, g)                              # folded rows of real data
    rows_per_partial = _cdiv(rows_f, num_partials)
    # Keep one pipeline buffer <= ~4 MiB: 2 inputs x 2 buffers stays well under
    # v7x's 64 MiB physical / 32 MiB default-scoped VMEM.
    tn_vmem = max(8, ((4 * 1024 * 1024) // (cf * itemsize)) // 8 * 8)
    tn = min(max_tile_rows, tn_vmem, _round_up(rows_per_partial, 8))
    n_tiles = _cdiv(rows_per_partial, tn)
    rows_f_total = num_partials * n_tiles * tn
    rows_total = rows_f_total * g

    # ---- zero-pad batch (diff == 0 there -> contributes nothing), keep the
    #      native dtype through the DMA, then apply the lane fold ----
    def prep(a):
        if rows_total != n:
            a = jnp.pad(a, ((0, rows_total - n), (0, 0)))
        return a.reshape(rows_f_total, cf)

    xp, tp = prep(x), prep(t)

    # 1/N (true N, not padded) pre-folded into the weights; tiled g times so each
    # folded lane group carries the same per-component weight.
    s = jnp.asarray(scaling_factors, dtype=jnp.float32).reshape(c)
    s2d = jnp.tile(s * (1.0 / n), g).reshape(1, cf)

    row_map = lambda p, k: (p * n_tiles + k, 0)

    out = pl.pallas_call(
        _mse_scaled_kernel,
        out_shape=jax.ShapeDtypeStruct((num_partials, 1, 1), jnp.float32),
        grid_spec=pltpu.PrefetchScalarGridSpec(
            num_scalar_prefetch=0,
            grid=(num_partials, n_tiles),
            in_specs=[
                pl.BlockSpec((tn, cf), row_map),
                pl.BlockSpec((tn, cf), row_map),
                pl.BlockSpec((1, cf), lambda p, k: (0, 0)),   # weights resident in VMEM
            ],
            out_specs=pl.BlockSpec((None, 1, 1), lambda p, k: (p, 0, 0)),
            scratch_shapes=[pltpu.VMEM((1, cf), jnp.float32)],
        ),
        compiler_params=pltpu.CompilerParams(
            dimension_semantics=("parallel", "arbitrary"),
            vmem_limit_bytes=32 * 1024 * 1024,
        ),
    )(xp, tp, s2d)

    # Sum the per-TensorCore partials -> scalar.
    return jnp.sum(out)


if __name__ == "__main__":
    key = jax.random.PRNGKey(0)
    k1, k2 = jax.random.split(key)

    # Small demo shape consistent with the module: batch of 8, 32 label components.
    N, C = 8, 32
    x = jax.random.normal(k1, (N, C), dtype=jnp.float32)
    t = jax.random.normal(k2, (N, C), dtype=jnp.float32)
    scaling_factors = jnp.linspace(0.5, 2.0, C, dtype=jnp.float32)

    result = jax.block_until_ready(mse_loss_scaled(x, t, scaling_factors))
    ref = jnp.dot(scaling_factors, jnp.mean((x - t) ** 2, axis=0))
    assert jnp.allclose(result, ref, rtol=1e-5, atol=1e-5), (result, ref)

    # Second check: ragged larger batch exercising padding + multi-tile grid +
    # the 2-way parallel partial split.
    N2 = 4101
    k3, k4 = jax.random.split(k2)
    x2 = jax.random.normal(k3, (N2, C), dtype=jnp.float32)
    t2 = jax.random.normal(k4, (N2, C), dtype=jnp.float32)
    result2 = jax.block_until_ready(mse_loss_scaled(x2, t2, scaling_factors))
    ref2 = jnp.dot(scaling_factors, jnp.mean((x2 - t2) ** 2, axis=0))
    assert jnp.allclose(result2, ref2, rtol=1e-4, atol=1e-5), (result2, ref2)

    print("KERNEL_OK")
</pallas_src>

<mosaic_0001>
module attributes {stable_mosaic.version = 11 : i64} {
  func.func @_mse_scaled_kernel(%arg0: i32, %arg1: i32, %arg2: memref<8x128xf32, #tpu.memory_space<vmem>>, %arg3: memref<8x128xf32, #tpu.memory_space<vmem>>, %arg4: memref<1x128xf32, #tpu.memory_space<vmem>>, %arg5: memref<1x1x1xf32, #tpu.memory_space<vmem>>, %arg6: memref<1x128xf32, #tpu.memory_space<vmem>>) attributes {dimension_semantics = [#tpu.dimension_semantics<parallel>, #tpu.dimension_semantics<arbitrary>], iteration_bounds = array<i64: 1, 1>, scalar_prefetch = 0 : i64, scratch_operands = 1 : i64, tpu.core_type = #tpu.core_type<tc>, window_params = [{transform_indices = @transform_0, window_bounds = array<i64: 8, 128>}, {transform_indices = @transform_1, window_bounds = array<i64: 8, 128>}, {pipeline_mode = #tpu.pipeline_mode<synchronous>, transform_indices = @transform_2, window_bounds = array<i64: 1, 128>}, {transform_indices = @transform_3, window_bounds = array<i64: 1, 1, 1>}]} {
    %c0_i32 = arith.constant 0 : i32
    %0 = arith.cmpi eq, %arg1, %c0_i32 : i32
    %1 = arith.extui %0 : i1 to i32
    %c0_i32_0 = arith.constant 0 : i32
    %2 = arith.cmpi ne, %1, %c0_i32_0 : i32
    scf.if %2 {
      %cst_10 = arith.constant 0.000000e+00 : f32
      %15 = vector.broadcast %cst_10 : f32 to vector<1x128xf32>
      %c0_11 = arith.constant 0 : index
      %c0_12 = arith.constant 0 : index
      %16 = vector.load %arg6[%c0_11, %c0_12] : memref<1x128xf32, #tpu.memory_space<vmem>>, vector<1x128xf32>
      tpu.vector_store %arg6[%c0_11, %c0_12], %15 {strides = array<i32>} : memref<1x128xf32, #tpu.memory_space<vmem>>, vector<1x128xf32>,
    } else {
    }
    %c0 = arith.constant 0 : index
    %c0_1 = arith.constant 0 : index
    %3 = vector.load %arg2[%c0, %c0_1] : memref<8x128xf32, #tpu.memory_space<vmem>>, vector<8x128xf32>
    %c0_2 = arith.constant 0 : index
    %c0_3 = arith.constant 0 : index
    %4 = vector.load %arg3[%c0_2, %c0_3] : memref<8x128xf32, #tpu.memory_space<vmem>>, vector<8x128xf32>
    %5 = arith.subf %3, %4 : vector<8x128xf32>
    %c0_4 = arith.constant 0 : index
    %c0_5 = arith.constant 0 : index
    %6 = vector.load %arg6[%c0_4, %c0_5] : memref<1x128xf32, #tpu.memory_space<vmem>>, vector<1x128xf32>
    %7 = arith.mulf %5, %5 : vector<8x128xf32>
    %cst = arith.constant dense<0.000000e+00> : vector<128xf32>
    %8 = vector.multi_reduction <add>, %7, %cst [0] : vector<8x128xf32> to vector<128xf32>
    %9 = vector.shape_cast %8 : vector<128xf32> to vector<1x128xf32>
    %10 = arith.addf %6, %9 : vector<1x128xf32>
    %c0_6 = arith.constant 0 : index
    %c0_7 = arith.constant 0 : index
    %11 = vector.load %arg6[%c0_6, %c0_7] : memref<1x128xf32, #tpu.memory_space<vmem>>, vector<1x128xf32>
    tpu.vector_store %arg6[%c0_6, %c0_7], %10 {strides = array<i32>} : memref<1x128xf32, #tpu.memory_space<vmem>>, vector<1x128xf32>,
    %c0_i32_8 = arith.constant 0 : i32
    %12 = arith.cmpi eq, %arg1, %c0_i32_8 : i32
    %13 = arith.extui %12 : i1 to i32
    %c0_i32_9 = arith.constant 0 : i32
    %14 = arith.cmpi ne, %13, %c0_i32_9 : i32
    scf.if %14 {
      %c0_10 = arith.constant 0 : index
      %c0_11 = arith.constant 0 : index
      %15 = vector.load %arg6[%c0_10, %c0_11] : memref<1x128xf32, #tpu.memory_space<vmem>>, vector<1x128xf32>
      %c0_12 = arith.constant 0 : index
      %c0_13 = arith.constant 0 : index
      %16 = vector.load %arg4[%c0_12, %c0_13] : memref<1x128xf32, #tpu.memory_space<vmem>>, vector<1x128xf32>
      %17 = arith.mulf %15, %16 : vector<1x128xf32>
      %cst_14 = arith.constant dense<0.000000e+00> : vector<1xf32>
      %18 = vector.multi_reduction <add>, %17, %cst_14 [1] : vector<1x128xf32> to vector<1xf32>
      %19 = vector.shape_cast %18 : vector<1xf32> to vector<1x1xf32>
      %c0_15 = arith.constant 0 : index
      %c0_16 = arith.constant 0 : index
      %c0_17 = arith.constant 0 : index
      %20 = vector.load %arg5[%c0_15, %c0_16, %c0_17] : memref<1x1x1xf32, #tpu.memory_space<vmem>>, vector<1x1x1xf32>
      %21 = vector.shape_cast %20 : vector<1x1x1xf32> to vector<1x1xf32>
      %22 = vector.shape_cast %19 : vector<1x1xf32> to vector<1x1x1xf32>
      tpu.vector_store %arg5[%c0_15, %c0_16, %c0_17], %22 {strides = array<i32>} : memref<1x1x1xf32, #tpu.memory_space<vmem>>, vector<1x1x1xf32>,
    } else {
    }
    return
  }
  func.func @transform_0(%arg0: i32, %arg1: i32) -> (i32, i32) {
    %c1_i32 = arith.constant 1 : i32
    %0 = arith.muli %arg0, %c1_i32 : i32
    %1 = arith.addi %0, %arg1 : i32
    %c0_i32 = arith.constant 0 : i32
    %c0_i32_0 = arith.constant 0 : i32
    return %1, %c0_i32 : i32, i32
  }
  func.func @transform_1(%arg0: i32, %arg1: i32) -> (i32, i32) {
    %c1_i32 = arith.constant 1 : i32
    %0 = arith.muli %arg0, %c1_i32 : i32
    %1 = arith.addi %0, %arg1 : i32
    %c0_i32 = arith.constant 0 : i32
    %c0_i32_0 = arith.constant 0 : i32
    return %1, %c0_i32 : i32, i32
  }
  func.func @transform_2(%arg0: i32, %arg1: i32) -> (i32, i32) {
    %c0_i32 = arith.constant 0 : i32
    %c0_i32_0 = arith.constant 0 : i32
    %c0_i32_1 = arith.constant 0 : i32
    return %c0_i32, %c0_i32_0 : i32, i32
  }
  func.func @transform_3(%arg0: i32, %arg1: i32) -> (i32, i32, i32) {
    %c0_i32 = arith.constant 0 : i32
    %c0_i32_0 = arith.constant 0 : i32
    %c0_i32_1 = arith.constant 0 : i32
    return %arg0, %c0_i32, %c0_i32_0 : i32, i32, i32
  }
}

</mosaic_0001>

<llo_original>
// kernel: tpu_custom_call.1
$region0: #{tpu_custom_call.1}
  #allocation0 [shape = 'u32[]', space=smem, size = 0x4, offset = 0x4, fixed_abs, tag = 'smem constant byte address 0x4 - core index']
  #allocation1 [shape = 'u32[144,128]{1,0:T(1,128)}', space=vmem, size = 0x12000, scoped, tag = 'internal scratch']
  #allocation2 [shape = 'f32[1,128]{1,0:T(1,128)}', space=vmem, size = 0x200, scoped, tag = 'scratch operand']
  %s0 = inlined_call_operand.hbm [shape: f32[8,128], index: 0, kind: input, shape index: {}]
  %s1 = inlined_call_operand.hbm [shape: f32[8,128], index: 1, kind: input, shape index: {}]
  %s2 = inlined_call_operand.vmem [shape: f32[1,128], index: 2, kind: input, shape index: {}]
  %s3 = inlined_call_operand.hbm [shape: f32[1,1,1], index: 3, kind: output, shape index: {}]
  %s4 = sld [smem:[#allocation0]]
  $region38: #{tpu_custom_call.1} parent=0
    _
  %s6 = ssub.s32 1, %s4
  %s7 = scalar_select 0, %s6, %s4
  $region1: #{tpu_custom_call.1} parent=0
    #allocation3 [shape = 'u8[4096]{0}', space=vmem, size = 0x1000, scoped, tag = 'input window, operand 0, single buffered']
    #allocation4 [shape = 's32[1]{0}', space=sflag, size = 0x4, scoped, tag = 'scoped memory for tpu_custom_call.1']
    #allocation5 [shape = 's32[1]{0}', space=sflag, size = 0x4, scoped, tag = 'scoped memory for tpu_custom_call.1']
    #allocation6 [shape = 'u8[4096]{0}', space=vmem, size = 0x1000, scoped, tag = 'input window, operand 1, single buffered']
    #allocation7 [shape = 's32[1]{0}', space=sflag, size = 0x4, scoped, tag = 'scoped memory for tpu_custom_call.1']
    #allocation8 [shape = 'u8[512]{0}', space=vmem, size = 0x400, scoped, tag = 'output window, operand 0, single buffered']
    %8 = vsyncpa [#allocation4], 0
    %9 = vsyncpa [#allocation7], 0
    %10 = vsyncpa [#allocation5], 0
    // Predicated region
    $region2: #{tpu_custom_call.1} parent=1 // pred_check
      _
    $region3: #{tpu_custom_call.1} parent=1 // pred_check_branch
      %12 = sbr.rel (0) target = $region5
    $region4: #{tpu_custom_call.1} parent=1 // pred_region
      %s13 = sadd.s32 0, 0
      %s15 = ssub.s32 128, 128
      %16 = vsyncadd [#allocation4], %s15
      %s17 = smul.addr %s13, 128
      %s18 = scalar_lea.hbm %s0, %s17
      %s20 = sshll.u32 [#allocation3], 4
      %s21 = int_to_ptr.vmem [resolvable:$true] %s20
      %23 = dma.hbm_to_vmem [thread:$0]  %s18, 128, %s21, [#allocation4]
    $region5: #{tpu_custom_call.1} parent=1 // pred_fallthru
      _
    // Predicated region
    $region6: #{tpu_custom_call.1} parent=1 // pred_check
      _
    $region7: #{tpu_custom_call.1} parent=1 // pred_check_branch
      %25 = sbr.rel (0) target = $region9
    $region8: #{tpu_custom_call.1} parent=1 // pred_region
      %s26 = sadd.s32 0, 0
      %s28 = ssub.s32 128, 128
      %29 = vsyncadd [#allocation7], %s28
      %s30 = smul.addr %s26, 128
      %s31 = scalar_lea.hbm %s1, %s30
      %s33 = sshll.u32 [#allocation6], 4
      %s34 = int_to_ptr.vmem [resolvable:$true] %s33
      %36 = dma.hbm_to_vmem [thread:$0]  %s31, 128, %s34, [#allocation7]
    $region9: #{tpu_custom_call.1} parent=1 // pred_fallthru
      _
    // Predicated region
    $region10: #{tpu_custom_call.1} parent=1 // pred_check
      _
    $region11: #{tpu_custom_call.1} parent=1 // pred_check_branch
      %38 = sbr.rel (0) target = $region13
    $region12: #{tpu_custom_call.1} parent=1 // pred_region
      _
    $region13: #{tpu_custom_call.1} parent=1 // pred_fallthru
      _
    // Predicated region
    $region14: #{tpu_custom_call.1} parent=1 // pred_check
      _
    $region15: #{tpu_custom_call.1} parent=1 // pred_check_branch
      %40 = sbr.rel (0) target = $region17
    $region16: #{tpu_custom_call.1} parent=1 // pred_region
      %41 = dma.done [#allocation4], 128
    $region17: #{tpu_custom_call.1} parent=1 // pred_fallthru
      _
    // Predicated region
    $region18: #{tpu_custom_call.1} parent=1 // pred_check
      _
    $region19: #{tpu_custom_call.1} parent=1 // pred_check_branch
      %43 = sbr.rel (0) target = $region21
    $region20: #{tpu_custom_call.1} parent=1 // pred_region
      %44 = dma.done [#allocation7], 128
    $region21: #{tpu_custom_call.1} parent=1 // pred_fallthru
      _
    %s45 = sadd.s32 0, 0
    %s46 = sadd.s32 0, 0
    %p47 = scmp.eq.s32.totalorder 0, 0
    // Predicated region
    $region22: #{tpu_custom_call.1} parent=1 // pred_check
      %p48 = pneg %p47
    $region23: #{tpu_custom_call.1} parent=1 // pred_check_branch
      %50 = sbr.rel (%p48) target = $region25
    $region24: #{tpu_custom_call.1} parent=1 // pred_region
      %51 = vst [vmem:[#allocation2] sm:$0x1] 0.0
    $region25: #{tpu_custom_call.1} parent=1 // pred_fallthru
      _
    %v52 = vld [vmem:[#allocation3] sm:$0xff]
    %v53 = vld [vmem:[#allocation6] sm:$0xff]
    %v54 = vsub.f32 %v52, %v53
    %v55 = vld [vmem:[#allocation2] sm:$0x1]
    %v56 = vmul.f32 %v54, %v54
    %v57 = vrot.slane %v56, 4
    %v58 = vadd.f32 %v56, %v57
    %v59 = vrot.slane %v58, 2
    %v60 = vadd.f32 %v58, %v59
    %v61 = vrot.slane %v60, 1
    %v62 = vadd.f32 %v60, %v61
    %v63 = vadd.f32 %v55, %v62
    %64 = vst [vmem:[#allocation2] sm:$0x1] %v63
    // Predicated region
    $region26: #{tpu_custom_call.1} parent=1 // pred_check
      %p65 = pneg %p47
    $region27: #{tpu_custom_call.1} parent=1 // pred_check_branch
      %67 = sbr.rel (%p65) target = $region29
    $region28: #{tpu_custom_call.1} parent=1 // pred_region
      %v68 = vld [vmem:[#allocation2] sm:$0x1]
      %v69 = vld [vmem:[%s2] sm:$0x1]
      %v70 = vmul.f32 %v68, %v69
      %vm71 = vcmask 1040384
      %v72 = vsel %vm71, %v70, 0.0
      %73 = vadd.xlane.f32.xlu0 %v72
      %v74 = vpop.xlane.xlu0 %73
      %vm75 = vcmask 0
      %76 = vst.msk [vmem:[#allocation8] sm:$0x1] %vm75, %v74
    $region29: #{tpu_custom_call.1} parent=1 // pred_fallthru
      _
    // Predicated region
    $region30: #{tpu_custom_call.1} parent=1 // pred_check
      _
    $region31: #{tpu_custom_call.1} parent=1 // pred_check_branch
      %78 = sbr.rel (0) target = $region33
    $region32: #{tpu_custom_call.1} parent=1 // pred_region
      %s80 = ssub.s32 16, 16
      %81 = vsyncadd [#allocation5], %s80
      %s83 = sshll.u32 [#allocation8], 4
      %s84 = int_to_ptr.vmem [resolvable:$true] %s83
      %86 = dma.vmem_to_hbm [thread:$0]  %s84, 16, %s3, [#allocation5]
    $region33: #{tpu_custom_call.1} parent=1 // pred_fallthru
      _
    // Predicated region
    $region34: #{tpu_custom_call.1} parent=1 // pred_check
      _
    $region35: #{tpu_custom_call.1} parent=1 // pred_check_branch
      %88 = sbr.rel (0) target = $region37
    $region36: #{tpu_custom_call.1} parent=1 // pred_region
      %89 = dma.done [#allocation5], 16
    $region37: #{tpu_custom_call.1} parent=1 // pred_fallthru
      _
    %90 = vsyncpa [#allocation4], 1
    %91 = vsyncpa [#allocation7], 1
    %92 = vsyncpa [#allocation5], 1

</llo_original>
